<compile_context>
chip_gen: v5e
topology: v5e:2x2
jax: 0.10.0
libtpu: 0.0.40
codegen_flags: <defaults>
</compile_context>

<pallas_src>
import jax
import jax.numpy as jnp
from jax.experimental import pallas as pl
from jax.experimental.pallas import tpu as pltpu


def _gauge_kernel(x_ref, m_ref, o_ref):
    # out = X * W_mask.  Mask arrives in its native (possibly narrow) dtype;
    # the in-kernel cast is free VPU work in a DMA-bound kernel.
    o_ref[...] = x_ref[...].astype(o_ref.dtype) * m_ref[...].astype(o_ref.dtype)


_TARGET_BLOCK_BYTES = 4 << 20   # ~4 MiB for the widest operand per grid step
_SUB = 32                       # row-tile multiple: satisfies (8/16/32, 128) packing
_MIN_VMEM_LIMIT = 32 << 20      # covers 2x(4+4+4) MiB buffers even on v5e


def _pick_lanes(total):
    """Largest lane width (multiple of 128) that divides total; else pad to 128."""
    for lanes in (512, 256, 128):
        if total % lanes == 0:
            return lanes, False
    return 128, True


def wt_gauge(x, w_mask):
    """Computes X * W_mask (WTGauge.forward) with a Pallas TPU kernel."""
    assert x.shape == w_mask.shape, "W_mask must match X shape (no broadcast needed)"
    orig_shape = x.shape

    # bool buffers are stored/streamed as int8 (1 B/elem); numerics unchanged.
    if w_mask.dtype == jnp.bool_:
        w_mask = w_mask.astype(jnp.int8)

    # Match torch type promotion (f32*int8 -> f32, bf16*f32 -> f32, ...).
    out_dtype = jnp.result_type(x.dtype, w_mask.dtype)

    total = x.size
    if total == 0:
        return jnp.zeros(orig_shape, out_dtype)

    lanes, needs_pad = _pick_lanes(total)
    x_flat = x.reshape(-1)
    m_flat = w_mask.reshape(-1)
    if needs_pad:
        # Ragged fallback: pad only up to one lane row; Pallas masks the
        # ragged row-axis tail block, so no further padding is needed.
        padded_total = pl.cdiv(total, lanes) * lanes
        pad = padded_total - total
        x_flat = jnp.pad(x_flat, (0, pad))
        m_flat = jnp.pad(m_flat, (0, pad))
    else:
        padded_total = total

    rows = padded_total // lanes
    x2 = x_flat.reshape(rows, lanes)
    m2 = m_flat.reshape(rows, lanes)

    x_item = jnp.dtype(x.dtype).itemsize
    m_item = jnp.dtype(m_flat.dtype).itemsize
    o_item = jnp.dtype(out_dtype).itemsize

    if rows <= _SUB:
        # Tiny input: a single full-extent block (always a legal block shape).
        tile_rows = rows
    else:
        # ~4 MiB for the widest operand, rounded to a multiple of 32 rows so
        # int8 / bf16 / f32 operands all satisfy their packed-sublane tiling.
        row_bytes = lanes * max(x_item, m_item, o_item)
        target_rows = max(_SUB, (_TARGET_BLOCK_BYTES // row_bytes) // _SUB * _SUB)
        # Guarantee >= 2 grid steps when possible so v7x's second TensorCore
        # is not idle for mid-size inputs (no effect on v5e/v6e).
        half_rows = (((rows + 1) // 2 + _SUB - 1) // _SUB) * _SUB
        tile_rows = max(_SUB, min(target_rows, half_rows))

    grid = (pl.cdiv(rows, tile_rows),)       # Pallas masks the tail block if any
    spec = pl.BlockSpec((tile_rows, lanes), lambda i: (i, 0))

    # 3 operands x 2 pipeline buffers per step, plus headroom; raise the scoped
    # VMEM limit so the 4 MiB blocks also fit v5e's 16 MiB default.
    step_bytes = tile_rows * lanes * (x_item + m_item + o_item)
    vmem_limit = max(2 * step_bytes + (4 << 20), _MIN_VMEM_LIMIT)

    bytes_accessed = padded_total * (x_item + m_item + o_item)

    out2 = pl.pallas_call(
        _gauge_kernel,
        out_shape=jax.ShapeDtypeStruct((rows, lanes), out_dtype),
        grid=grid,
        in_specs=[spec, spec],
        out_specs=spec,
        compiler_params=pltpu.CompilerParams(
            dimension_semantics=("parallel",),   # megacore sharding on v7x
            vmem_limit_bytes=vmem_limit,
        ),
        cost_estimate=pl.CostEstimate(
            flops=total, transcendentals=0, bytes_accessed=bytes_accessed),
    )(x2, m2)

    out_flat = out2.reshape(-1)
    if needs_pad:
        out_flat = out_flat[:total]
    return out_flat.reshape(orig_shape)


if __name__ == "__main__":
    key = jax.random.PRNGKey(0)
    kx, km, kx2, km2 = jax.random.split(key, 4)

    # Case 1: NCHW f32 input with a binary f32 mask buffer (module's usual use).
    N, C, H, W = 2, 4, 16, 16
    x = jax.random.normal(kx, (N, C, H, W), dtype=jnp.float32)
    w_mask = (jax.random.uniform(km, (N, C, H, W)) > 0.5).astype(jnp.float32)
    out = jax.block_until_ready(wt_gauge(x, w_mask))
    ref = x * w_mask
    assert out.shape == ref.shape and out.dtype == ref.dtype
    assert jnp.allclose(out, ref), "case 1: mismatch vs reference"

    # Case 2: narrow int8 mask + a size that is not a multiple of 128,
    # exercising the in-kernel cast and the ragged/padded fallback path.
    x2 = jax.random.normal(kx2, (3, 5, 7, 11), dtype=jnp.float32)
    m2 = (jax.random.uniform(km2, (3, 5, 7, 11)) > 0.5).astype(jnp.int8)
    out2 = jax.block_until_ready(wt_gauge(x2, m2))
    ref2 = x2 * m2
    assert out2.shape == ref2.shape and out2.dtype == ref2.dtype
    assert jnp.allclose(out2, ref2), "case 2: mismatch vs reference"

    print("KERNEL_OK")
</pallas_src>

<mosaic_0001>
module attributes {stable_mosaic.version = 11 : i64} {
  func.func @_gauge_kernel(%arg0: i32, %arg1: memref<4x512xf32, #tpu.memory_space<vmem>>, %arg2: memref<4x512xf32, #tpu.memory_space<vmem>>, %arg3: memref<4x512xf32, #tpu.memory_space<vmem>>) attributes {dimension_semantics = [#tpu.dimension_semantics<parallel>], iteration_bounds = array<i64: 1>, scalar_prefetch = 0 : i64, scratch_operands = 0 : i64, tpu.core_type = #tpu.core_type<tc>, window_params = [{transform_indices = @transform_0, window_bounds = array<i64: 4, 512>}, {transform_indices = @transform_1, window_bounds = array<i64: 4, 512>}, {transform_indices = @transform_2, window_bounds = array<i64: 4, 512>}]} {
    %c0 = arith.constant 0 : index
    %c0_0 = arith.constant 0 : index
    %0 = vector.load %arg1[%c0, %c0_0] : memref<4x512xf32, #tpu.memory_space<vmem>>, vector<4x512xf32>
    %c0_1 = arith.constant 0 : index
    %c0_2 = arith.constant 0 : index
    %1 = vector.load %arg2[%c0_1, %c0_2] : memref<4x512xf32, #tpu.memory_space<vmem>>, vector<4x512xf32>
    %2 = arith.mulf %0, %1 : vector<4x512xf32>
    %c0_3 = arith.constant 0 : index
    %c0_4 = arith.constant 0 : index
    %3 = vector.load %arg3[%c0_3, %c0_4] : memref<4x512xf32, #tpu.memory_space<vmem>>, vector<4x512xf32>
    tpu.vector_store %arg3[%c0_3, %c0_4], %2 {strides = array<i32>} : memref<4x512xf32, #tpu.memory_space<vmem>>, vector<4x512xf32>,
    return
  }
  func.func @transform_0(%arg0: i32) -> (i32, i32) {
    %c0_i32 = arith.constant 0 : i32
    %c0_i32_0 = arith.constant 0 : i32
    return %arg0, %c0_i32 : i32, i32
  }
  func.func @transform_1(%arg0: i32) -> (i32, i32) {
    %c0_i32 = arith.constant 0 : i32
    %c0_i32_0 = arith.constant 0 : i32
    return %arg0, %c0_i32 : i32, i32
  }
  func.func @transform_2(%arg0: i32) -> (i32, i32) {
    %c0_i32 = arith.constant 0 : i32
    %c0_i32_0 = arith.constant 0 : i32
    return %arg0, %c0_i32 : i32, i32
  }
}

</mosaic_0001>

<llo_original>
// kernel: tpu_custom_call.1
$region0: #{tpu_custom_call.1}
  #allocation0 [shape = 'u32[]', space=smem, size = 0x4, offset = 0x4, fixed_abs, tag = 'smem constant byte address 0x4 - core index']
  #allocation1 [shape = 'u32[72,128]{1,0:T(1,128)}', space=vmem, size = 0x9000, scoped, tag = 'internal scratch']
  %s0 = inlined_call_operand.hbm [shape: f32[4,512], index: 0, kind: input, shape index: {}]
  %s1 = inlined_call_operand.hbm [shape: f32[4,512], index: 1, kind: input, shape index: {}]
  %s2 = inlined_call_operand.hbm [shape: f32[4,512], index: 2, kind: output, shape index: {}]
  %s3 = sld [smem:[#allocation0]]
  $region26: #{tpu_custom_call.1} parent=0
    _
  %s5 = ssub.s32 1, %s3
  %s6 = scalar_select 0, %s5, %s3
  $region1: #{tpu_custom_call.1} parent=0
    #allocation2 [shape = 'u8[8192]{0}', space=vmem, size = 0x2000, scoped, tag = 'input window, operand 0, single buffered']
    #allocation3 [shape = 's32[1]{0}', space=sflag, size = 0x4, scoped, tag = 'scoped memory for tpu_custom_call.1']
    #allocation4 [shape = 's32[1]{0}', space=sflag, size = 0x4, scoped, tag = 'scoped memory for tpu_custom_call.1']
    #allocation5 [shape = 'u8[8192]{0}', space=vmem, size = 0x2000, scoped, tag = 'input window, operand 1, single buffered']
    #allocation6 [shape = 's32[1]{0}', space=sflag, size = 0x4, scoped, tag = 'scoped memory for tpu_custom_call.1']
    #allocation7 [shape = 'u8[8192]{0}', space=vmem, size = 0x2000, scoped, tag = 'output window, operand 0, single buffered']
    %7 = vsyncpa [#allocation3], 0
    %8 = vsyncpa [#allocation6], 0
    %9 = vsyncpa [#allocation4], 0
    // Predicated region
    $region2: #{tpu_custom_call.1} parent=1 // pred_check
      _
    $region3: #{tpu_custom_call.1} parent=1 // pred_check_branch
      %11 = sbr.rel (0) target = $region5
    $region4: #{tpu_custom_call.1} parent=1 // pred_region
      %13 = vsyncadd [#allocation3], 0
      %s15 = sshll.u32 %s0, 4
      %s16 = int_to_ptr.hbm [resolvable:$true] %s15
      %s17 = sshll.u32 [#allocation2], 4
      %s18 = int_to_ptr.vmem [resolvable:$true] %s17
      %20 = dma.hbm_to_vmem [thread:$0]  %s16, 256, %s18, [#allocation3]
    $region5: #{tpu_custom_call.1} parent=1 // pred_fallthru
      _
    // Predicated region
    $region6: #{tpu_custom_call.1} parent=1 // pred_check
      _
    $region7: #{tpu_custom_call.1} parent=1 // pred_check_branch
      %22 = sbr.rel (0) target = $region9
    $region8: #{tpu_custom_call.1} parent=1 // pred_region
      %24 = vsyncadd [#allocation6], 0
      %s26 = sshll.u32 %s1, 4
      %s27 = int_to_ptr.hbm [resolvable:$true] %s26
      %s28 = sshll.u32 [#allocation5], 4
      %s29 = int_to_ptr.vmem [resolvable:$true] %s28
      %31 = dma.hbm_to_vmem [thread:$0]  %s27, 256, %s29, [#allocation6]
    $region9: #{tpu_custom_call.1} parent=1 // pred_fallthru
      _
    // Predicated region
    $region10: #{tpu_custom_call.1} parent=1 // pred_check
      _
    $region11: #{tpu_custom_call.1} parent=1 // pred_check_branch
      %33 = sbr.rel (0) target = $region13
    $region12: #{tpu_custom_call.1} parent=1 // pred_region
      %35 = dma.done [#allocation3], 256
    $region13: #{tpu_custom_call.1} parent=1 // pred_fallthru
      _
    // Predicated region
    $region14: #{tpu_custom_call.1} parent=1 // pred_check
      _
    $region15: #{tpu_custom_call.1} parent=1 // pred_check_branch
      %37 = sbr.rel (0) target = $region17
    $region16: #{tpu_custom_call.1} parent=1 // pred_region
      %39 = dma.done [#allocation6], 256
    $region17: #{tpu_custom_call.1} parent=1 // pred_fallthru
      _
    %v40 = vld [vmem:[#allocation2] sm:$0xff]
    %v41 = vld [vmem:[#allocation2 + $0x8] sm:$0xff]
    %v42 = vld [vmem:[#allocation5] sm:$0xff]
    %v43 = vld [vmem:[#allocation5 + $0x8] sm:$0xff]
    %v44 = vmul.f32 %v40, %v42
    %v45 = vmul.f32 %v41, %v43
    %46 = vst [vmem:[#allocation7] sm:$0xff] %v44
    %47 = vst [vmem:[#allocation7 + $0x8] sm:$0xff] %v45
    // Predicated region
    $region18: #{tpu_custom_call.1} parent=1 // pred_check
      _
    $region19: #{tpu_custom_call.1} parent=1 // pred_check_branch
      %49 = sbr.rel (0) target = $region21
    $region20: #{tpu_custom_call.1} parent=1 // pred_region
      %51 = vsyncadd [#allocation4], 0
      %s53 = sshll.u32 [#allocation7], 4
      %s54 = int_to_ptr.vmem [resolvable:$true] %s53
      %s55 = sshll.u32 %s2, 4
      %s56 = int_to_ptr.hbm [resolvable:$true] %s55
      %58 = dma.vmem_to_hbm [thread:$0]  %s54, 256, %s56, [#allocation4]
    $region21: #{tpu_custom_call.1} parent=1 // pred_fallthru
      _
    // Predicated region
    $region22: #{tpu_custom_call.1} parent=1 // pred_check
      _
    $region23: #{tpu_custom_call.1} parent=1 // pred_check_branch
      %60 = sbr.rel (0) target = $region25
    $region24: #{tpu_custom_call.1} parent=1 // pred_region
      %62 = dma.done [#allocation4], 256
    $region25: #{tpu_custom_call.1} parent=1 // pred_fallthru
      _
    %63 = vsyncpa [#allocation3], 1
    %64 = vsyncpa [#allocation6], 1
    %65 = vsyncpa [#allocation4], 1

</llo_original>
